<compile_context>
chip_gen: v6e
topology: v6e:2x2x1
jax: 0.10.0
libtpu: 0.0.40
codegen_flags: <defaults>
</compile_context>

<pallas_src>
import jax
import jax.numpy as jnp
from jax import lax
from jax.experimental import pallas as pl
from jax.experimental.pallas import tpu as pltpu

# "config" stand-ins: hidden size and output vocab = len(config.dict) + len(config.ns)
HIDDEN_SIZE = 32
DICT_LEN = 120
NS_LEN = 8
VOCAB = DICT_LEN + NS_LEN  # 128

_LANE = 128
_NEG_BIG = -1e30  # finite "minus infinity" for padded vocab lanes (avoids inf-inf NaN)


def decoder_kernel(x_ref, w_ref, b_ref, o_ref):
    # x_ref: (TB, H), w_ref: (Vp, H) -- PyTorch Linear layout, consumed as-is,
    # b_ref: (1, Vp), o_ref: (TB, Vp).
    # Linear: x @ W^T via dot_general contracting (1, 1); f32 MXU accumulation.
    logits = lax.dot_general(
        x_ref[...], w_ref[...],
        dimension_numbers=(((1,), (1,)), ((), ())),
        preferred_element_type=jnp.float32,
    ) + b_ref[...]
    # Numerically-stable log_softmax along the last (lane) axis.
    m = jnp.max(logits, axis=-1, keepdims=True)
    shifted = logits - m
    lse = jnp.log(jnp.sum(jnp.exp(shifted), axis=-1, keepdims=True))
    o_ref[...] = (shifted - lse).astype(o_ref.dtype)


def decoder_forward(encoder_hidden, weight, bias, *, block_b=128):
    """encoder_hidden: (B, 1, H) f32; weight: (V, H); bias: (V,) -> (B, V) log-probs."""
    x = jnp.squeeze(encoder_hidden, axis=1)  # (B, H) -- squeeze(dim=1)
    B, H = x.shape
    V = weight.shape[0]

    # Pad the vocab axis up to a lane multiple (no-op today: V == 128). Pad columns
    # get a huge negative bias so they contribute exp(.) == 0 to the denominator.
    Vp = ((V + _LANE - 1) // _LANE) * _LANE
    if Vp != V:
        weight = jnp.pad(weight, ((0, Vp - V), (0, 0)))
        bias = jnp.pad(bias, (0, Vp - V), constant_values=_NEG_BIG)
    b2 = bias.reshape(1, Vp)

    cost = pl.CostEstimate(
        flops=2 * B * H * V,
        transcendentals=B * V,
        bytes_accessed=4 * (B * H + Vp * H + Vp + B * Vp),
    )

    if B > block_b:
        # Batched path: tile only B. Pad B up to a tile multiple if needed (pad rows
        # compute garbage that is sliced off; they never pollute real rows because
        # log_softmax is row-wise). Weight + bias index_maps return (0, 0) every step
        # so they stay VMEM-resident; V stays un-tiled (lane-dense, unmasked vst).
        Bp = ((B + block_b - 1) // block_b) * block_b
        xp = jnp.pad(x, ((0, Bp - B), (0, 0))) if Bp != B else x
        out = pl.pallas_call(
            decoder_kernel,
            out_shape=jax.ShapeDtypeStruct((Bp, Vp), jnp.float32),
            grid=(Bp // block_b,),
            in_specs=[
                pl.BlockSpec((block_b, H), lambda i: (i, 0)),
                pl.BlockSpec((Vp, H), lambda i: (0, 0)),
                pl.BlockSpec((1, Vp), lambda i: (0, 0)),
            ],
            out_specs=pl.BlockSpec((block_b, Vp), lambda i: (i, 0)),
            compiler_params=pltpu.CompilerParams(
                dimension_semantics=("parallel",)),
            cost_estimate=cost,
        )(xp, weight, b2)
        if Bp != B:
            out = out[:B]
    else:
        # Small-batch path: no grid, no pipelining machinery -- full arrays in VMEM.
        out = pl.pallas_call(
            decoder_kernel,
            out_shape=jax.ShapeDtypeStruct((B, Vp), jnp.float32),
            in_specs=[
                pl.BlockSpec(memory_space=pltpu.MemorySpace.VMEM),
                pl.BlockSpec(memory_space=pltpu.MemorySpace.VMEM),
                pl.BlockSpec(memory_space=pltpu.MemorySpace.VMEM),
            ],
            out_specs=pl.BlockSpec(memory_space=pltpu.MemorySpace.VMEM),
            cost_estimate=cost,
        )(x, weight, b2)

    if Vp != V:
        out = out[:, :V]
    return out


def reference_forward(encoder_hidden, weight, bias):
    x = jnp.squeeze(encoder_hidden, axis=1)
    logits = x @ weight.T + bias
    return jax.nn.log_softmax(logits, axis=-1)


if __name__ == "__main__":
    key = jax.random.PRNGKey(0)
    k_x, k_w, k_b, k_xb = jax.random.split(key, 4)

    # Deterministic parameter init (PyTorch Linear shapes: weight (V, H), bias (V,))
    bound = 1.0 / (HIDDEN_SIZE ** 0.5)
    weight = jax.random.uniform(k_w, (VOCAB, HIDDEN_SIZE),
                                minval=-bound, maxval=bound, dtype=jnp.float32)
    bias = jax.random.uniform(k_b, (VOCAB,),
                              minval=-bound, maxval=bound, dtype=jnp.float32)

    # --- small-batch path (matches the module's typical decode call) -------------
    B = 2
    encoder_hidden = jax.random.normal(k_x, (B, 1, HIDDEN_SIZE), dtype=jnp.float32)
    out = decoder_forward(encoder_hidden, weight, bias)
    jax.block_until_ready(out)
    ref = reference_forward(encoder_hidden, weight, bias)
    assert out.shape == (B, VOCAB)
    assert jnp.allclose(out, ref, atol=1e-5, rtol=1e-5), "small-batch mismatch"
    assert jnp.allclose(jnp.sum(jnp.exp(out), axis=-1), 1.0, atol=1e-5)

    # --- batched path (exercises the B-tiled, core-parallel grid) ----------------
    Bb = 256
    encoder_hidden_b = jax.random.normal(k_xb, (Bb, 1, HIDDEN_SIZE), dtype=jnp.float32)
    out_b = decoder_forward(encoder_hidden_b, weight, bias, block_b=128)
    jax.block_until_ready(out_b)
    ref_b = reference_forward(encoder_hidden_b, weight, bias)
    assert out_b.shape == (Bb, VOCAB)
    assert jnp.allclose(out_b, ref_b, atol=1e-5, rtol=1e-5), "batched mismatch"
    assert jnp.allclose(jnp.sum(jnp.exp(out_b), axis=-1), 1.0, atol=1e-5)

    print("KERNEL_OK")
</pallas_src>

<mosaic_0001>
module attributes {stable_mosaic.version = 11 : i64} {
  func.func @decoder_kernel(%arg0: memref<2x32xf32, #tpu.memory_space<vmem>>, %arg1: memref<128x32xf32, #tpu.memory_space<vmem>>, %arg2: memref<1x128xf32, #tpu.memory_space<vmem>>, %arg3: memref<2x128xf32, #tpu.memory_space<vmem>>) attributes {dimension_semantics = [], scalar_prefetch = 0 : i64, scratch_operands = 0 : i64, tpu.core_type = #tpu.core_type<tc>} {
    %c0 = arith.constant 0 : index
    %c0_0 = arith.constant 0 : index
    %0 = vector.load %arg0[%c0, %c0_0] : memref<2x32xf32, #tpu.memory_space<vmem>>, vector<2x32xf32>
    %c0_1 = arith.constant 0 : index
    %c0_2 = arith.constant 0 : index
    %1 = vector.load %arg1[%c0_1, %c0_2] : memref<128x32xf32, #tpu.memory_space<vmem>>, vector<128x32xf32>
    %cst = arith.constant dense<0.000000e+00> : vector<2x128xf32>
    %2 = tpu.matmul %0, %1, %cst {dimension_numbers = #tpu.dot_dimension_numbers<[1], [1], [0], [0], [0, 0, 1, 0], [], []>} : vector<2x32xf32>, vector<128x32xf32>, vector<2x128xf32> -> vector<2x128xf32>
    %c0_3 = arith.constant 0 : index
    %c0_4 = arith.constant 0 : index
    %3 = vector.load %arg2[%c0_3, %c0_4] : memref<1x128xf32, #tpu.memory_space<vmem>>, vector<1x128xf32>
    %4 = vector.broadcast %3 : vector<1x128xf32> to vector<2x128xf32>
    %5 = arith.addf %2, %4 : vector<2x128xf32>
    %cst_5 = arith.constant dense<0xFF800000> : vector<2xf32>
    %6 = vector.multi_reduction <maximumf>, %5, %cst_5 [1] : vector<2x128xf32> to vector<2xf32>
    %7 = vector.shape_cast %6 : vector<2xf32> to vector<2x1xf32>
    %8 = vector.broadcast %7 : vector<2x1xf32> to vector<2x128xf32>
    %9 = arith.subf %5, %8 : vector<2x128xf32>
    %10 = math.exp %9 : vector<2x128xf32>
    %cst_6 = arith.constant dense<0.000000e+00> : vector<2xf32>
    %11 = vector.multi_reduction <add>, %10, %cst_6 [1] : vector<2x128xf32> to vector<2xf32>
    %12 = vector.shape_cast %11 : vector<2xf32> to vector<2x1xf32>
    %13 = math.log %12 : vector<2x1xf32>
    %14 = vector.broadcast %13 : vector<2x1xf32> to vector<2x128xf32>
    %15 = arith.subf %9, %14 : vector<2x128xf32>
    %c0_7 = arith.constant 0 : index
    %c0_8 = arith.constant 0 : index
    %16 = vector.load %arg3[%c0_7, %c0_8] : memref<2x128xf32, #tpu.memory_space<vmem>>, vector<2x128xf32>
    tpu.vector_store %arg3[%c0_7, %c0_8], %15 {strides = array<i32>} : memref<2x128xf32, #tpu.memory_space<vmem>>, vector<2x128xf32>,
    return
  }
}

</mosaic_0001>

<llo_original>
// kernel: tpu_custom_call.1
$region0: #{tpu_custom_call.1}
  #allocation0 [shape = 'u32[]', space=smem, size = 0x4, offset = 0x4, fixed_abs, tag = 'smem constant byte address 0x4 - core index']
  #allocation1 [shape = 'u32[144,128]{1,0:T(1,128)}', space=vmem, size = 0x12000, scoped, tag = 'internal scratch']
  %s0 = inlined_call_operand.vmem [shape: f32[2,32], index: 0, kind: input, shape index: {}]
  %s1 = inlined_call_operand.vmem [shape: f32[128,32], index: 1, kind: input, shape index: {}]
  %s2 = inlined_call_operand.vmem [shape: f32[1,128], index: 2, kind: input, shape index: {}]
  %s3 = inlined_call_operand.hbm [shape: f32[2,128], index: 3, kind: output, shape index: {}]
  %s4 = sld [smem:[#allocation0]]
  $region22: #{tpu_custom_call.1} parent=0
    _
  %s6 = ssub.s32 1, %s4
  %s7 = scalar_select 0, %s6, %s4
  $region1: #{tpu_custom_call.1} parent=0
    #allocation2 [shape = 'u8[1024]{0}', space=vmem, size = 0x400, scoped, tag = 'output window, operand 0, single buffered']
    #allocation3 [shape = 's32[1]{0}', space=sflag, size = 0x4, scoped, tag = 'scoped memory for tpu_custom_call.1']
    %8 = vsyncpa [#allocation3], 0
    // Predicated region
    $region2: #{tpu_custom_call.1} parent=1 // pred_check
      _
    $region3: #{tpu_custom_call.1} parent=1 // pred_check_branch
      %10 = sbr.rel (0) target = $region5
    $region4: #{tpu_custom_call.1} parent=1 // pred_region
      _
    $region5: #{tpu_custom_call.1} parent=1 // pred_fallthru
      _
    // Predicated region
    $region6: #{tpu_custom_call.1} parent=1 // pred_check
      _
    $region7: #{tpu_custom_call.1} parent=1 // pred_check_branch
      %12 = sbr.rel (0) target = $region9
    $region8: #{tpu_custom_call.1} parent=1 // pred_region
      _
    $region9: #{tpu_custom_call.1} parent=1 // pred_fallthru
      _
    // Predicated region
    $region10: #{tpu_custom_call.1} parent=1 // pred_check
      _
    $region11: #{tpu_custom_call.1} parent=1 // pred_check_branch
      %14 = sbr.rel (0) target = $region13
    $region12: #{tpu_custom_call.1} parent=1 // pred_region
      _
    $region13: #{tpu_custom_call.1} parent=1 // pred_fallthru
      _
    %v15 = vld [vmem:[%s0] sm:$0x3]
    %v16 = vld [vmem:[%s1] sm:$0xff]
    %v17 = vld [vmem:[%s1 + $0x8] sm:$0xff]
    %v18 = vld [vmem:[%s1 + $0x10] sm:$0xff]
    %v19 = vld [vmem:[%s1 + $0x18] sm:$0xff]
    %v20 = vld [vmem:[%s1 + $0x20] sm:$0xff]
    %v21 = vld [vmem:[%s1 + $0x28] sm:$0xff]
    %v22 = vld [vmem:[%s1 + $0x30] sm:$0xff]
    %v23 = vld [vmem:[%s1 + $0x38] sm:$0xff]
    %v24 = vld [vmem:[%s1 + $0x40] sm:$0xff]
    %v25 = vld [vmem:[%s1 + $0x48] sm:$0xff]
    %v26 = vld [vmem:[%s1 + $0x50] sm:$0xff]
    %v27 = vld [vmem:[%s1 + $0x58] sm:$0xff]
    %v28 = vld [vmem:[%s1 + $0x60] sm:$0xff]
    %v29 = vld [vmem:[%s1 + $0x68] sm:$0xff]
    %v30 = vld [vmem:[%s1 + $0x70] sm:$0xff]
    %v31 = vld [vmem:[%s1 + $0x78] sm:$0xff]
    %v32 = vld [vmem:[%s2] sm:$0x1]
    %v34 = vlaneseq
    %v35 = vshrl.u32 %v34, 7
    %v36 = vsub.s32 0, %v35
    %v37 = vrot.slane %v32, %v36
    %vm39 = vcmask 261120
    %v41 = vsel %vm39, %v15, 0
    %v44 = vsel %vm39, %v16, 0
    %v47 = vsel %vm39, %v17, 0
    %v50 = vsel %vm39, %v18, 0
    %v53 = vsel %vm39, %v19, 0
    %v56 = vsel %vm39, %v20, 0
    %v59 = vsel %vm39, %v21, 0
    %v62 = vsel %vm39, %v22, 0
    %v65 = vsel %vm39, %v23, 0
    %v68 = vsel %vm39, %v24, 0
    %v71 = vsel %vm39, %v25, 0
    %v74 = vsel %vm39, %v26, 0
    %v77 = vsel %vm39, %v27, 0
    %v80 = vsel %vm39, %v28, 0
    %v83 = vsel %vm39, %v29, 0
    %v86 = vsel %vm39, %v30, 0
    %v89 = vsel %vm39, %v31, 0
    %91 = vmatprep.subr.mxu0 0.0
    %92 = vmatpush1.xpose.msra.mxu0 %v89
    %93 = vmatprep.subr.mxu0 0.0
    %94 = vmatpush1.xpose.msra.mxu0 %v86
    %95 = vmatprep.subr.mxu0 0.0
    %96 = vmatpush1.xpose.msra.mxu0 %v83
    %97 = vmatprep.subr.mxu0 0.0
    %98 = vmatpush1.xpose.msra.mxu0 %v80
    %99 = vmatprep.subr.mxu0 0.0
    %100 = vmatpush1.xpose.msra.mxu0 %v77
    %101 = vmatprep.subr.mxu0 0.0
    %102 = vmatpush1.xpose.msra.mxu0 %v74
    %103 = vmatprep.subr.mxu0 0.0
    %104 = vmatpush1.xpose.msra.mxu0 %v71
    %105 = vmatprep.subr.mxu0 0.0
    %106 = vmatpush1.xpose.msra.mxu0 %v68
    %107 = vmatprep.subr.mxu0 0.0
    %108 = vmatpush1.xpose.msra.mxu0 %v65
    %109 = vmatprep.subr.mxu0 0.0
    %110 = vmatpush1.xpose.msra.mxu0 %v62
    %111 = vmatprep.subr.mxu0 0.0
    %112 = vmatpush1.xpose.msra.mxu0 %v59
    %113 = vmatprep.subr.mxu0 0.0
    %114 = vmatpush1.xpose.msra.mxu0 %v56
    %115 = vmatprep.subr.mxu0 0.0
    %116 = vmatpush1.xpose.msra.mxu0 %v53
    %117 = vmatprep.subr.mxu0 0.0
    %118 = vmatpush1.xpose.msra.mxu0 %v50
    %119 = vmatprep.subr.mxu0 0.0
    %120 = vmatpush1.xpose.msra.mxu0 %v47
    %121 = vmatprep.subr.mxu0 0.0
    %122 = vmatpush1.xpose.msra.mxu0 %v44
    %123 = vmatprep.subr.mxu0 0.0
    %124 = vmatpush2.xpose.msra.mxu0 0.0
    %125 = vmatprep.subr.mxu0 0.0
    %126 = vmatpush2.xpose.msra.mxu0 0.0
    %127 = vmatprep.subr.mxu0 0.0
    %128 = vmatpush2.xpose.msra.mxu0 0.0
    %129 = vmatprep.subr.mxu0 0.0
    %130 = vmatpush2.xpose.msra.mxu0 0.0
    %131 = vmatprep.subr.mxu0 0.0
    %132 = vmatpush2.xpose.msra.mxu0 0.0
    %133 = vmatprep.subr.mxu0 0.0
    %134 = vmatpush2.xpose.msra.mxu0 0.0
    %135 = vmatprep.subr.mxu0 0.0
    %136 = vmatpush2.xpose.msra.mxu0 0.0
    %137 = vmatprep.subr.mxu0 0.0
    %138 = vmatpush2.xpose.msra.mxu0 0.0
    %139 = vmatprep.subr.mxu0 0.0
    %140 = vmatpush2.xpose.msra.mxu0 0.0
    %141 = vmatprep.subr.mxu0 0.0
    %142 = vmatpush2.xpose.msra.mxu0 0.0
    %143 = vmatprep.subr.mxu0 0.0
    %144 = vmatpush2.xpose.msra.mxu0 0.0
    %145 = vmatprep.subr.mxu0 0.0
    %146 = vmatpush2.xpose.msra.mxu0 0.0
    %147 = vmatprep.subr.mxu0 0.0
    %148 = vmatpush2.xpose.msra.mxu0 0.0
    %149 = vmatprep.subr.mxu0 0.0
    %150 = vmatpush2.xpose.msra.mxu0 0.0
    %151 = vmatprep.subr.mxu0 0.0
    %152 = vmatpush2.xpose.msra.mxu0 0.0
    %153 = vmatprep.subr.mxu0 0.0
    %154 = vmatpush2.xpose.msra.mxu0 0.0
    %155 = vmatprep.mubr.f32.mxu0 0.0
    %156 = vmatmul.mubr.f32.gmra.mxu0 %v41
    %v157 = vpop.f32.mrf.mxu0
    %v158 = vadd.f32 %v37, %v157
    %v159 = vpop.f32.mrf.mxu0
    %160 = vdwg.mxu0
    %vm161 = vcmask 1041408
    %v162 = vsel %vm161, %v158, -inf
    %163 = vmax.xlane.f32.xlu0 %v162
    %v164 = vpop.xlane.xlu0 %163
    %v165 = vsub.f32 %v158, %v164
    %v166 = vmul.f32 %v165, 1.442695
    %v167 = vpow.pop %v166
    %v168 = vsel %vm161, %v167, 0.0
    %169 = vadd.xlane.f32.xlu0 %v168
    %v170 = vpop.xlane.xlu0 %169
    %v171 = vlog2.pop %v170
    %v172 = vmul.f32 %v171, 0.6931472
    %v173 = vsub.f32 %v165, %v172
    %174 = vst [vmem:[#allocation2] sm:$0x3] %v173
    // Predicated region
    $region14: #{tpu_custom_call.1} parent=1 // pred_check
      _
    $region15: #{tpu_custom_call.1} parent=1 // pred_check_branch
      %176 = sbr.rel (0) target = $region17
    $region16: #{tpu_custom_call.1} parent=1 // pred_region
      %s178 = ssub.s32 32, 32
      %179 = vsyncadd [#allocation3], %s178
      %s181 = sshll.u32 [#allocation2], 4
      %s182 = int_to_ptr.vmem [resolvable:$true] %s181
      %184 = dma.vmem_to_hbm [thread:$0]  %s182, 32, %s3, [#allocation3]
    $region17: #{tpu_custom_call.1} parent=1 // pred_fallthru
      _
    // Predicated region
    $region18: #{tpu_custom_call.1} parent=1 // pred_check
      _
    $region19: #{tpu_custom_call.1} parent=1 // pred_check_branch
      %186 = sbr.rel (0) target = $region21
    $region20: #{tpu_custom_call.1} parent=1 // pred_region
      %187 = dma.done [#allocation3], 32
    $region21: #{tpu_custom_call.1} parent=1 // pred_fallthru
      _
    %188 = vsyncpa [#allocation3], 1

</llo_original>
